<compile_context>
chip_gen: v7x
topology: tpu7x:2x2x1
jax: 0.10.0
libtpu: 0.0.40
codegen_flags: <defaults>
</compile_context>

<pallas_src>
import jax
import jax.numpy as jnp
from jax.experimental import pallas as pl
from jax.experimental.pallas import tpu as pltpu

# ---- static problem sizes (LocalCNN defaults) ----
B = 2              # batch
C = 1              # in_channels
H = W = 16         # spatial
F = 8              # num_filters
NC = 10            # num_classes
K = 3              # conv kernel size
HW = H * W         # 256 -> lane-dense last dim (2 full f32 vregs)
KKC = K * K * C    # 9 conv taps


def local_cnn_kernel(patches_ref, convp_ref, fcp_ref, out_ref):
    """Single invocation, whole batch.

    patches_ref: (KKC, B, HW)   im2col'd input, lane-dense
    convp_ref  : (F, KKC+1)     [conv weight | conv bias]
    fcp_ref    : (F+1, NC)      [fc weight (pre-T, pre-scaled by 1/HW) ; fc bias]
    out_ref    : (B, NC)        logits
    """
    # Conv bias folded into the accumulator init.
    bc = convp_ref[:, KKC:KKC + 1]                              # (F, 1)
    acc = jnp.broadcast_to(bc[None, :, :], (B, F, HW))          # (B, F, HW) f32

    wc = convp_ref[:, :KKC]                                     # (F, KKC), loaded once

    # 3x3 conv (padding=1) as 9 broadcast MACs on the lane-dense accumulator.
    for t in range(KKC):
        patch = patches_ref[t]                                  # (B, HW)
        w_t = wc[:, t:t + 1]                                    # (F, 1)
        acc = acc + patch[:, None, :] * w_t[None, :, :]         # (B, F, HW)

    conv = jnp.maximum(acc, 0.0)                                # ReLU

    # AdaptiveAvgPool2d(1): lane-axis sum; the 1/(H*W) scale lives in fcp.
    pooled = jnp.sum(conv, axis=2, keepdims=True)               # (B, F, 1)

    # FC on the VPU: broadcast-multiply + sublane reduce (no MXU for a 2x8x10).
    wf = fcp_ref[:F, :]                                         # (F, NC)
    bf = fcp_ref[F:F + 1, :]                                    # (1, NC)
    logits = jnp.sum(pooled * wf[None, :, :], axis=1) + bf      # (B, NC)

    out_ref[...] = logits.astype(out_ref.dtype)


def local_cnn_forward(x, conv_w, conv_b, fc_w, fc_b):
    """x: (B, C, H, W) NCHW. conv_w: (F, C, K, K) OIHW. fc_w: (NC, F). -> (B, NC)."""
    x = x.astype(jnp.float32)
    # im2col in the wrapper: tap index t = (kh*K + kw)*C + c
    x_pad = jnp.pad(x, ((0, 0), (0, 0), (1, 1), (1, 1)))        # (B, C, H+2, W+2)
    taps = [x_pad[:, c, kh:kh + H, kw:kw + W].reshape(B, HW)
            for kh in range(K) for kw in range(K) for c in range(C)]
    patches = jnp.stack(taps, axis=0)                           # (KKC, B, HW)

    # Weights reorganized to match tap ordering / lane-dense layout, then packed.
    wc = jnp.transpose(conv_w, (0, 2, 3, 1)).reshape(F, KKC).astype(jnp.float32)
    convp = jnp.concatenate(
        [wc, conv_b.reshape(F, 1).astype(jnp.float32)], axis=1)         # (F, KKC+1)
    wf = (fc_w.T / float(HW)).astype(jnp.float32)                       # (F, NC)
    fcp = jnp.concatenate(
        [wf, fc_b.reshape(1, NC).astype(jnp.float32)], axis=0)          # (F+1, NC)

    return pl.pallas_call(
        local_cnn_kernel,
        out_shape=jax.ShapeDtypeStruct((B, NC), jnp.float32),
        in_specs=[
            pl.BlockSpec(memory_space=pltpu.MemorySpace.VMEM),
            pl.BlockSpec(memory_space=pltpu.MemorySpace.VMEM),
            pl.BlockSpec(memory_space=pltpu.MemorySpace.VMEM),
        ],
        out_specs=pl.BlockSpec(memory_space=pltpu.MemorySpace.VMEM),
    )(patches, convp, fcp)


def reference_forward(x, conv_w, conv_b, fc_w, fc_b):
    """Pure-JAX reference matching the PyTorch module semantics."""
    conv = jax.lax.conv_general_dilated(
        x, conv_w, window_strides=(1, 1), padding="SAME",
        dimension_numbers=("NCHW", "OIHW", "NCHW"),
        precision=jax.lax.Precision.HIGHEST)
    conv = jnp.maximum(conv + conv_b[None, :, None, None], 0.0)
    pooled = jnp.mean(conv, axis=(2, 3))                        # (B, F)
    return jnp.dot(pooled, fc_w.T,
                   precision=jax.lax.Precision.HIGHEST) + fc_b[None, :]


if __name__ == "__main__":
    key = jax.random.PRNGKey(0)
    kx, kw1, kb1, kw2, kb2 = jax.random.split(key, 5)

    # deterministic synthetic parameters (shapes from LocalCNN.__init__)
    x = jax.random.normal(kx, (B, C, H, W), jnp.float32)
    conv_w = jax.random.normal(kw1, (F, C, K, K), jnp.float32) * 0.1
    conv_b = jax.random.normal(kb1, (F,), jnp.float32) * 0.1
    fc_w = jax.random.normal(kw2, (NC, F), jnp.float32) * 0.1
    fc_b = jax.random.normal(kb2, (NC,), jnp.float32) * 0.1

    out = jax.jit(local_cnn_forward)(x, conv_w, conv_b, fc_w, fc_b)
    out = jax.block_until_ready(out)

    ref = reference_forward(x, conv_w, conv_b, fc_w, fc_b)
    assert out.shape == (B, NC), out.shape
    assert jnp.allclose(out, ref, atol=1e-4, rtol=1e-4), (out, ref)

    print("KERNEL_OK")
</pallas_src>

<mosaic_0001>
module attributes {stable_mosaic.version = 11 : i64} {
  func.func @local_cnn_kernel(%arg0: memref<9x2x256xf32, #tpu.memory_space<vmem>>, %arg1: memref<8x10xf32, #tpu.memory_space<vmem>>, %arg2: memref<9x10xf32, #tpu.memory_space<vmem>>, %arg3: memref<2x10xf32, #tpu.memory_space<vmem>>) attributes {dimension_semantics = [], scalar_prefetch = 0 : i64, scratch_operands = 0 : i64, tpu.core_type = #tpu.core_type<tc>} {
    %c0 = arith.constant 0 : index
    %c9 = arith.constant 9 : index
    %0 = vector.load %arg1[%c0, %c9] : memref<8x10xf32, #tpu.memory_space<vmem>>, vector<8x1xf32>
    %1 = vector.shape_cast %0 : vector<8x1xf32> to vector<1x8x1xf32>
    %2 = vector.shape_cast %1 : vector<1x8x1xf32> to vector<1x8x1xf32>
    %3 = vector.broadcast %2 : vector<1x8x1xf32> to vector<2x8x256xf32>
    %c0_0 = arith.constant 0 : index
    %c0_1 = arith.constant 0 : index
    %4 = vector.load %arg1[%c0_0, %c0_1] : memref<8x10xf32, #tpu.memory_space<vmem>>, vector<8x9xf32>
    %c0_2 = arith.constant 0 : index
    %c0_3 = arith.constant 0 : index
    %c0_4 = arith.constant 0 : index
    %5 = vector.load %arg0[%c0_2, %c0_3, %c0_4] : memref<9x2x256xf32, #tpu.memory_space<vmem>>, vector<1x2x256xf32>
    %6 = vector.shape_cast %5 : vector<1x2x256xf32> to vector<2x256xf32>
    %7 = vector.extract_strided_slice %4 {offsets = [0, 0], sizes = [8, 1], strides = [1, 1]} : vector<8x9xf32> to vector<8x1xf32>
    %8 = vector.shape_cast %6 : vector<2x256xf32> to vector<2x1x256xf32>
    %9 = vector.shape_cast %7 : vector<8x1xf32> to vector<1x8x1xf32>
    %10 = vector.broadcast %8 : vector<2x1x256xf32> to vector<2x8x256xf32>
    %11 = vector.broadcast %9 : vector<1x8x1xf32> to vector<2x8x256xf32>
    %12 = arith.mulf %10, %11 : vector<2x8x256xf32>
    %13 = arith.addf %3, %12 : vector<2x8x256xf32>
    %c1 = arith.constant 1 : index
    %c0_5 = arith.constant 0 : index
    %c0_6 = arith.constant 0 : index
    %14 = vector.load %arg0[%c1, %c0_5, %c0_6] : memref<9x2x256xf32, #tpu.memory_space<vmem>>, vector<1x2x256xf32>
    %15 = vector.shape_cast %14 : vector<1x2x256xf32> to vector<2x256xf32>
    %16 = vector.extract_strided_slice %4 {offsets = [0, 1], sizes = [8, 1], strides = [1, 1]} : vector<8x9xf32> to vector<8x1xf32>
    %17 = vector.shape_cast %15 : vector<2x256xf32> to vector<2x1x256xf32>
    %18 = vector.shape_cast %16 : vector<8x1xf32> to vector<1x8x1xf32>
    %19 = vector.broadcast %17 : vector<2x1x256xf32> to vector<2x8x256xf32>
    %20 = vector.broadcast %18 : vector<1x8x1xf32> to vector<2x8x256xf32>
    %21 = arith.mulf %19, %20 : vector<2x8x256xf32>
    %22 = arith.addf %13, %21 : vector<2x8x256xf32>
    %c2 = arith.constant 2 : index
    %c0_7 = arith.constant 0 : index
    %c0_8 = arith.constant 0 : index
    %23 = vector.load %arg0[%c2, %c0_7, %c0_8] : memref<9x2x256xf32, #tpu.memory_space<vmem>>, vector<1x2x256xf32>
    %24 = vector.shape_cast %23 : vector<1x2x256xf32> to vector<2x256xf32>
    %25 = vector.extract_strided_slice %4 {offsets = [0, 2], sizes = [8, 1], strides = [1, 1]} : vector<8x9xf32> to vector<8x1xf32>
    %26 = vector.shape_cast %24 : vector<2x256xf32> to vector<2x1x256xf32>
    %27 = vector.shape_cast %25 : vector<8x1xf32> to vector<1x8x1xf32>
    %28 = vector.broadcast %26 : vector<2x1x256xf32> to vector<2x8x256xf32>
    %29 = vector.broadcast %27 : vector<1x8x1xf32> to vector<2x8x256xf32>
    %30 = arith.mulf %28, %29 : vector<2x8x256xf32>
    %31 = arith.addf %22, %30 : vector<2x8x256xf32>
    %c3 = arith.constant 3 : index
    %c0_9 = arith.constant 0 : index
    %c0_10 = arith.constant 0 : index
    %32 = vector.load %arg0[%c3, %c0_9, %c0_10] : memref<9x2x256xf32, #tpu.memory_space<vmem>>, vector<1x2x256xf32>
    %33 = vector.shape_cast %32 : vector<1x2x256xf32> to vector<2x256xf32>
    %34 = vector.extract_strided_slice %4 {offsets = [0, 3], sizes = [8, 1], strides = [1, 1]} : vector<8x9xf32> to vector<8x1xf32>
    %35 = vector.shape_cast %33 : vector<2x256xf32> to vector<2x1x256xf32>
    %36 = vector.shape_cast %34 : vector<8x1xf32> to vector<1x8x1xf32>
    %37 = vector.broadcast %35 : vector<2x1x256xf32> to vector<2x8x256xf32>
    %38 = vector.broadcast %36 : vector<1x8x1xf32> to vector<2x8x256xf32>
    %39 = arith.mulf %37, %38 : vector<2x8x256xf32>
    %40 = arith.addf %31, %39 : vector<2x8x256xf32>
    %c4 = arith.constant 4 : index
    %c0_11 = arith.constant 0 : index
    %c0_12 = arith.constant 0 : index
    %41 = vector.load %arg0[%c4, %c0_11, %c0_12] : memref<9x2x256xf32, #tpu.memory_space<vmem>>, vector<1x2x256xf32>
    %42 = vector.shape_cast %41 : vector<1x2x256xf32> to vector<2x256xf32>
    %43 = vector.extract_strided_slice %4 {offsets = [0, 4], sizes = [8, 1], strides = [1, 1]} : vector<8x9xf32> to vector<8x1xf32>
    %44 = vector.shape_cast %42 : vector<2x256xf32> to vector<2x1x256xf32>
    %45 = vector.shape_cast %43 : vector<8x1xf32> to vector<1x8x1xf32>
    %46 = vector.broadcast %44 : vector<2x1x256xf32> to vector<2x8x256xf32>
    %47 = vector.broadcast %45 : vector<1x8x1xf32> to vector<2x8x256xf32>
    %48 = arith.mulf %46, %47 : vector<2x8x256xf32>
    %49 = arith.addf %40, %48 : vector<2x8x256xf32>
    %c5 = arith.constant 5 : index
    %c0_13 = arith.constant 0 : index
    %c0_14 = arith.constant 0 : index
    %50 = vector.load %arg0[%c5, %c0_13, %c0_14] : memref<9x2x256xf32, #tpu.memory_space<vmem>>, vector<1x2x256xf32>
    %51 = vector.shape_cast %50 : vector<1x2x256xf32> to vector<2x256xf32>
    %52 = vector.extract_strided_slice %4 {offsets = [0, 5], sizes = [8, 1], strides = [1, 1]} : vector<8x9xf32> to vector<8x1xf32>
    %53 = vector.shape_cast %51 : vector<2x256xf32> to vector<2x1x256xf32>
    %54 = vector.shape_cast %52 : vector<8x1xf32> to vector<1x8x1xf32>
    %55 = vector.broadcast %53 : vector<2x1x256xf32> to vector<2x8x256xf32>
    %56 = vector.broadcast %54 : vector<1x8x1xf32> to vector<2x8x256xf32>
    %57 = arith.mulf %55, %56 : vector<2x8x256xf32>
    %58 = arith.addf %49, %57 : vector<2x8x256xf32>
    %c6 = arith.constant 6 : index
    %c0_15 = arith.constant 0 : index
    %c0_16 = arith.constant 0 : index
    %59 = vector.load %arg0[%c6, %c0_15, %c0_16] : memref<9x2x256xf32, #tpu.memory_space<vmem>>, vector<1x2x256xf32>
    %60 = vector.shape_cast %59 : vector<1x2x256xf32> to vector<2x256xf32>
    %61 = vector.extract_strided_slice %4 {offsets = [0, 6], sizes = [8, 1], strides = [1, 1]} : vector<8x9xf32> to vector<8x1xf32>
    %62 = vector.shape_cast %60 : vector<2x256xf32> to vector<2x1x256xf32>
    %63 = vector.shape_cast %61 : vector<8x1xf32> to vector<1x8x1xf32>
    %64 = vector.broadcast %62 : vector<2x1x256xf32> to vector<2x8x256xf32>
    %65 = vector.broadcast %63 : vector<1x8x1xf32> to vector<2x8x256xf32>
    %66 = arith.mulf %64, %65 : vector<2x8x256xf32>
    %67 = arith.addf %58, %66 : vector<2x8x256xf32>
    %c7 = arith.constant 7 : index
    %c0_17 = arith.constant 0 : index
    %c0_18 = arith.constant 0 : index
    %68 = vector.load %arg0[%c7, %c0_17, %c0_18] : memref<9x2x256xf32, #tpu.memory_space<vmem>>, vector<1x2x256xf32>
    %69 = vector.shape_cast %68 : vector<1x2x256xf32> to vector<2x256xf32>
    %70 = vector.extract_strided_slice %4 {offsets = [0, 7], sizes = [8, 1], strides = [1, 1]} : vector<8x9xf32> to vector<8x1xf32>
    %71 = vector.shape_cast %69 : vector<2x256xf32> to vector<2x1x256xf32>
    %72 = vector.shape_cast %70 : vector<8x1xf32> to vector<1x8x1xf32>
    %73 = vector.broadcast %71 : vector<2x1x256xf32> to vector<2x8x256xf32>
    %74 = vector.broadcast %72 : vector<1x8x1xf32> to vector<2x8x256xf32>
    %75 = arith.mulf %73, %74 : vector<2x8x256xf32>
    %76 = arith.addf %67, %75 : vector<2x8x256xf32>
    %c8 = arith.constant 8 : index
    %c0_19 = arith.constant 0 : index
    %c0_20 = arith.constant 0 : index
    %77 = vector.load %arg0[%c8, %c0_19, %c0_20] : memref<9x2x256xf32, #tpu.memory_space<vmem>>, vector<1x2x256xf32>
    %78 = vector.shape_cast %77 : vector<1x2x256xf32> to vector<2x256xf32>
    %79 = vector.extract_strided_slice %4 {offsets = [0, 8], sizes = [8, 1], strides = [1, 1]} : vector<8x9xf32> to vector<8x1xf32>
    %80 = vector.shape_cast %78 : vector<2x256xf32> to vector<2x1x256xf32>
    %81 = vector.shape_cast %79 : vector<8x1xf32> to vector<1x8x1xf32>
    %82 = vector.broadcast %80 : vector<2x1x256xf32> to vector<2x8x256xf32>
    %83 = vector.broadcast %81 : vector<1x8x1xf32> to vector<2x8x256xf32>
    %84 = arith.mulf %82, %83 : vector<2x8x256xf32>
    %85 = arith.addf %76, %84 : vector<2x8x256xf32>
    %cst = arith.constant 0.000000e+00 : f32
    %86 = vector.broadcast %cst : f32 to vector<2x8x256xf32>
    %87 = arith.maximumf %85, %86 : vector<2x8x256xf32>
    %cst_21 = arith.constant dense<0.000000e+00> : vector<2x8xf32>
    %88 = vector.multi_reduction <add>, %87, %cst_21 [2] : vector<2x8x256xf32> to vector<2x8xf32>
    %89 = vector.shape_cast %88 : vector<2x8xf32> to vector<2x8x1xf32>
    %c0_22 = arith.constant 0 : index
    %c0_23 = arith.constant 0 : index
    %90 = vector.load %arg2[%c0_22, %c0_23] : memref<9x10xf32, #tpu.memory_space<vmem>>, vector<8x10xf32>
    %c8_24 = arith.constant 8 : index
    %c0_25 = arith.constant 0 : index
    %91 = vector.load %arg2[%c8_24, %c0_25] : memref<9x10xf32, #tpu.memory_space<vmem>>, vector<1x10xf32>
    %92 = vector.shape_cast %90 : vector<8x10xf32> to vector<1x8x10xf32>
    %93 = vector.broadcast %89 : vector<2x8x1xf32> to vector<2x8x10xf32>
    %94 = vector.broadcast %92 : vector<1x8x10xf32> to vector<2x8x10xf32>
    %95 = arith.mulf %93, %94 : vector<2x8x10xf32>
    %cst_26 = arith.constant dense<0.000000e+00> : vector<2x10xf32>
    %96 = vector.multi_reduction <add>, %95, %cst_26 [1] : vector<2x8x10xf32> to vector<2x10xf32>
    %97 = vector.broadcast %91 : vector<1x10xf32> to vector<2x10xf32>
    %98 = arith.addf %96, %97 : vector<2x10xf32>
    %c0_27 = arith.constant 0 : index
    %c0_28 = arith.constant 0 : index
    %99 = vector.load %arg3[%c0_27, %c0_28] : memref<2x10xf32, #tpu.memory_space<vmem>>, vector<2x10xf32>
    tpu.vector_store %arg3[%c0_27, %c0_28], %98 {strides = array<i32>} : memref<2x10xf32, #tpu.memory_space<vmem>>, vector<2x10xf32>,
    return
  }
}

</mosaic_0001>

<llo_original>
// kernel: squeeze.9
$region0: #{squeeze.9}
  %s0 = inlined_call_operand.vmem [shape: f32[2,1,16,16], index: 0, kind: input, shape index: {}]
  %s1 = inlined_call_operand.vmem [shape: f32[1,2,256], index: 1, kind: output, shape index: {}]
  $region1: #{squeeze.9} parent=0
    #allocation0 [shape = 'u8[8192]{0}', space=vmem, size = 0x2000, scoped, tag = 'scoped mem for output reshape']
    %v2 = vld [vmem:[%s0] ss:$8 sm:$0xf]
    %vm3 = vcmask 130048
    %4 = vst.msk [vmem:[#allocation0] ss:$8 sm:$0x3] %vm3, %v2
    %s5 = scalar_lea.vmem [#allocation0], 4294967281
    %6 = vst.msk [vmem:[%s5] ss:$8 sm:$0xc] %vm3, %v2
    %s7 = scalar_lea.vmem %s0, 7
    %s8 = smov 3
    %v9 = vld [vmem:[%s7] ss:$16 sm:%s8]
    %s10 = scalar_lea.vmem %s0, 4294967279
    %s11 = smov 12
    %v12 = vld [vmem:[%s10] ss:$16 sm:%s11]
    %vm13 = vcmask 1043458
    %v14 = vsel %vm13, %v12, %v9
    %15 = vrot.lane.b32.xlu0 %v14, 112
    %v16 = vpop.permute.xlu0 %15
    %vm17 = vcmask 1048448
    %18 = vst.msk [vmem:[#allocation0] sm:$0x3] %vm17, %v16
    %s19 = scalar_lea.vmem [#allocation0], 6
    %20 = vst.msk [vmem:[%s19] sm:$0xc] %vm17, %v16
    %s21 = scalar_lea.vmem %s0, 6
    %s22 = smov 3
    %v23 = vld [vmem:[%s21] ss:$16 sm:%s22]
    %s24 = scalar_lea.vmem %s0, 4294967278
    %s25 = smov 12
    %v26 = vld [vmem:[%s24] ss:$16 sm:%s25]
    %vm27 = vcmask 1043458
    %v28 = vsel %vm27, %v26, %v23
    %29 = vrot.lane.b32.xlu0 %v28, 96
    %v30 = vpop.permute.xlu0 %29
    %vm31 = vcmask 917248
    %32 = vst.msk [vmem:[#allocation0] sm:$0x3] %vm31, %v30
    %s33 = scalar_lea.vmem [#allocation0], 6
    %34 = vst.msk [vmem:[%s33] sm:$0xc] %vm31, %v30
    %s35 = scalar_lea.vmem %s0, 5
    %s36 = smov 3
    %v37 = vld [vmem:[%s35] ss:$16 sm:%s36]
    %s38 = scalar_lea.vmem %s0, 4294967277
    %s39 = smov 12
    %v40 = vld [vmem:[%s38] ss:$16 sm:%s39]
    %vm41 = vcmask 1043458
    %v42 = vsel %vm41, %v40, %v37
    %43 = vrot.lane.b32.xlu0 %v42, 80
    %v44 = vpop.permute.xlu0 %43
    %vm45 = vcmask 786048
    %46 = vst.msk [vmem:[#allocation0] sm:$0x3] %vm45, %v44
    %s47 = scalar_lea.vmem [#allocation0], 6
    %48 = vst.msk [vmem:[%s47] sm:$0xc] %vm45, %v44
    %s49 = scalar_lea.vmem %s0, 4
    %s50 = smov 3
    %v51 = vld [vmem:[%s49] ss:$16 sm:%s50]
    %s52 = scalar_lea.vmem %s0, 4294967276
    %s53 = smov 12
    %v54 = vld [vmem:[%s52] ss:$16 sm:%s53]
    %vm55 = vcmask 1043458
    %v56 = vsel %vm55, %v54, %v51
    %57 = vrot.lane.b32.xlu0 %v56, 64
    %v58 = vpop.permute.xlu0 %57
    %vm59 = vcmask 654848
    %60 = vst.msk [vmem:[#allocation0] sm:$0x3] %vm59, %v58
    %s61 = scalar_lea.vmem [#allocation0], 6
    %62 = vst.msk [vmem:[%s61] sm:$0xc] %vm59, %v58
    %s63 = scalar_lea.vmem %s0, 3
    %s64 = smov 3
    %v65 = vld [vmem:[%s63] ss:$16 sm:%s64]
    %s66 = scalar_lea.vmem %s0, 4294967275
    %s67 = smov 12
    %v68 = vld [vmem:[%s66] ss:$16 sm:%s67]
    %vm69 = vcmask 1043458
    %v70 = vsel %vm69, %v68, %v65
    %71 = vrot.lane.b32.xlu0 %v70, 48
    %v72 = vpop.permute.xlu0 %71
    %vm73 = vcmask 523648
    %74 = vst.msk [vmem:[#allocation0] sm:$0x3] %vm73, %v72
    %s75 = scalar_lea.vmem [#allocation0], 6
    %76 = vst.msk [vmem:[%s75] sm:$0xc] %vm73, %v72
    %s77 = scalar_lea.vmem %s0, 2
    %s78 = smov 3
    %v79 = vld [vmem:[%s77] ss:$16 sm:%s78]
    %s80 = scalar_lea.vmem %s0, 4294967274
    %s81 = smov 12
    %v82 = vld [vmem:[%s80] ss:$16 sm:%s81]
    %vm83 = vcmask 1043458
    %v84 = vsel %vm83, %v82, %v79
    %85 = vrot.lane.b32.xlu0 %v84, 32
    %v86 = vpop.permute.xlu0 %85
    %vm87 = vcmask 392448
    %88 = vst.msk [vmem:[#allocation0] sm:$0x3] %vm87, %v86
    %s89 = scalar_lea.vmem [#allocation0], 6
    %90 = vst.msk [vmem:[%s89] sm:$0xc] %vm87, %v86
    %s91 = scalar_lea.vmem %s0, 1
    %s92 = smov 3
    %v93 = vld [vmem:[%s91] ss:$16 sm:%s92]
    %s94 = scalar_lea.vmem %s0, 4294967273
    %s95 = smov 12
    %v96 = vld [vmem:[%s94] ss:$16 sm:%s95]
    %vm97 = vcmask 1043458
    %v98 = vsel %vm97, %v96, %v93
    %99 = vrot.lane.b32.xlu0 %v98, 16
    %v100 = vpop.permute.xlu0 %99
    %vm101 = vcmask 261248
    %102 = vst.msk [vmem:[#allocation0] sm:$0x3] %vm101, %v100
    %s103 = scalar_lea.vmem [#allocation0], 6
    %104 = vst.msk [vmem:[%s103] sm:$0xc] %vm101, %v100
    %s106 = sshllo.u32 0, 2
    %v108 = vld [vmem:[#allocation0] sm:%s106]
    %s109 = sshllo.u32 0, 2
    %110 = vst [vmem:[%s1] sm:%s109] %v108
    %s111 = scalar_lea.vmem [#allocation0], 8
    %v112 = vld [vmem:[%s111] sm:%s106]
    %s113 = sshllo.u32 0, 2
    %s114 = scalar_lea.vmem %s1, 2
    %115 = vst [vmem:[%s114] sm:%s113] %v112

// kernel: local_cnn_forward.1
$region0: #{local_cnn_forward.1}
  #allocation0 [shape = 'u32[]', space=smem, size = 0x4, offset = 0x4, fixed_abs, tag = 'smem constant byte address 0x4 - core index']
  #allocation1 [shape = 'u32[144,128]{1,0:T(1,128)}', space=vmem, size = 0x12000, scoped, tag = 'internal scratch']
  %s0 = inlined_call_operand.vmem [shape: f32[9,2,256], index: 0, kind: input, shape index: {}]
  %s1 = inlined_call_operand.vmem [shape: f32[8,10], index: 1, kind: input, shape index: {}]
  %s2 = inlined_call_operand.vmem [shape: f32[9,10], index: 2, kind: input, shape index: {}]
  %s3 = inlined_call_operand.hbm [shape: f32[2,10], index: 3, kind: output, shape index: {}]
  %s4 = sld [smem:[#allocation0]]
  $region22: #{local_cnn_forward.1} parent=0
    _
  %s6 = ssub.s32 1, %s4
  %s7 = scalar_select 0, %s6, %s4
  $region1: #{local_cnn_forward.1} parent=0
    #allocation2 [shape = 'u8[1024]{0}', space=vmem, size = 0x400, scoped, tag = 'output window, operand 0, single buffered']
    #allocation3 [shape = 's32[1]{0}', space=sflag, size = 0x4, scoped, tag = 'scoped memory for local_cnn_forward.1']
    %8 = vsyncpa [#allocation3], 0
    // Predicated region
    $region2: #{local_cnn_forward.1} parent=1 // pred_check
      _
    $region3: #{local_cnn_forward.1} parent=1 // pred_check_branch
      %10 = sbr.rel (0) target = $region5
    $region4: #{local_cnn_forward.1} parent=1 // pred_region
      _
    $region5: #{local_cnn_forward.1} parent=1 // pred_fallthru
      _
    // Predicated region
    $region6: #{local_cnn_forward.1} parent=1 // pred_check
      _
    $region7: #{local_cnn_forward.1} parent=1 // pred_check_branch
      %12 = sbr.rel (0) target = $region9
    $region8: #{local_cnn_forward.1} parent=1 // pred_region
      _
    $region9: #{local_cnn_forward.1} parent=1 // pred_fallthru
      _
    // Predicated region
    $region10: #{local_cnn_forward.1} parent=1 // pred_check
      _
    $region11: #{local_cnn_forward.1} parent=1 // pred_check_branch
      %14 = sbr.rel (0) target = $region13
    $region12: #{local_cnn_forward.1} parent=1 // pred_region
      _
    $region13: #{local_cnn_forward.1} parent=1 // pred_fallthru
      _
    %v15 = vld [vmem:[%s1] sm:$0xff]
    %17 = vset.pattern.permute.xlu0 9
    %18 = vperm.xlu0 %17, %v15
    %v19 = vpop.permute.xlu0 %18
    %v21 = vld [vmem:[%s0] sm:$0xf]
    %v24 = vunpack.c.l.s4 1966171168
    %v25 = vunpack.c.0.s8 %v24
    %v26 = vlaneseq
    %v27 = vshrl.u32 %v26, 7
    %v28 = vsub.s32 %v25, %v27
    %v29 = vrot.slane %v21, %v28
    %v30 = vcombine.high %v29, %v29
    %v31 = vlaneseq
    %v32 = vshrl.u32 %v31, 7
    %v33 = vsub.s32 0, %v32
    %v34 = vrot.slane %v29, %v33
    %v35 = vlaneseq
    %v36 = vshrl.u32 %v35, 7
    %v37 = vsub.s32 1, %v36
    %v38 = vrot.slane %v29, %v37
    %v39 = vlaneseq
    %v40 = vshrl.u32 %v39, 7
    %v41 = vsub.s32 0, %v40
    %v42 = vrot.slane %v30, %v41
    %v43 = vlaneseq
    %v44 = vshrl.u32 %v43, 7
    %v45 = vsub.s32 1, %v44
    %v46 = vrot.slane %v30, %v45
    %51 = vset.pattern.permute.xlu0 0
    %52 = vperm.xlu0 %51, %v15
    %v53 = vpop.permute.xlu0 %52
    %v55 = vmul.f32 %v34, %v53
    %v56 = vmul.f32 %v38, %v53
    %v57 = vmul.f32 %v42, %v53
    %v58 = vmul.f32 %v46, %v53
    %v59 = vadd.f32 %v19, %v55
    %v60 = vadd.f32 %v19, %v56
    %v61 = vadd.f32 %v19, %v57
    %v62 = vadd.f32 %v19, %v58
    %s63 = scalar_lea.vmem %s0, 4
    %v64 = vld [vmem:[%s63] sm:$0xf]
    %v67 = vunpack.c.l.s4 1966171168
    %v68 = vunpack.c.0.s8 %v67
    %v69 = vlaneseq
    %v70 = vshrl.u32 %v69, 7
    %v71 = vsub.s32 %v68, %v70
    %v72 = vrot.slane %v64, %v71
    %v73 = vcombine.high %v72, %v72
    %v74 = vlaneseq
    %v75 = vshrl.u32 %v74, 7
    %v76 = vsub.s32 0, %v75
    %v77 = vrot.slane %v72, %v76
    %v78 = vlaneseq
    %v79 = vshrl.u32 %v78, 7
    %v80 = vsub.s32 1, %v79
    %v81 = vrot.slane %v72, %v80
    %v82 = vlaneseq
    %v83 = vshrl.u32 %v82, 7
    %v84 = vsub.s32 0, %v83
    %v85 = vrot.slane %v73, %v84
    %v86 = vlaneseq
    %v87 = vshrl.u32 %v86, 7
    %v88 = vsub.s32 1, %v87
    %v89 = vrot.slane %v73, %v88
    %94 = vset.pattern.permute.xlu0 1
    %95 = vperm.xlu0 %94, %v15
    %v96 = vpop.permute.xlu0 %95
    %v98 = vmul.f32 %v77, %v96
    %v99 = vmul.f32 %v81, %v96
    %v100 = vmul.f32 %v85, %v96
    %v101 = vmul.f32 %v89, %v96
    %v102 = vadd.f32 %v59, %v98
    %v103 = vadd.f32 %v60, %v99
    %v104 = vadd.f32 %v61, %v100
    %v105 = vadd.f32 %v62, %v101
    %s106 = scalar_lea.vmem %s0, 8
    %v107 = vld [vmem:[%s106] sm:$0xf]
    %v110 = vunpack.c.l.s4 1966171168
    %v111 = vunpack.c.0.s8 %v110
    %v112 = vlaneseq
    %v113 = vshrl.u32 %v112, 7
    %v114 = vsub.s32 %v111, %v113
    %v115 = vrot.slane %v107, %v114
    %v116 = vcombine.high %v115, %v115
    %v117 = vlaneseq
    %v118 = vshrl.u32 %v117, 7
    %v119 = vsub.s32 0, %v118
    %v120 = vrot.slane %v115, %v119
    %v121 = vlaneseq
    %v122 = vshrl.u32 %v121, 7
    %v123 = vsub.s32 1, %v122
    %v124 = vrot.slane %v115, %v123
    %v125 = vlaneseq
    %v126 = vshrl.u32 %v125, 7
    %v127 = vsub.s32 0, %v126
    %v128 = vrot.slane %v116, %v127
    %v129 = vlaneseq
    %v130 = vshrl.u32 %v129, 7
    %v131 = vsub.s32 1, %v130
    %v132 = vrot.slane %v116, %v131
    %137 = vset.pattern.permute.xlu0 2
    %138 = vperm.xlu0 %137, %v15
    %v139 = vpop.permute.xlu0 %138
    %v141 = vmul.f32 %v120, %v139
    %v142 = vmul.f32 %v124, %v139
    %v143 = vmul.f32 %v128, %v139
    %v144 = vmul.f32 %v132, %v139
    %v145 = vadd.f32 %v102, %v141
    %v146 = vadd.f32 %v103, %v142
    %v147 = vadd.f32 %v104, %v143
    %v148 = vadd.f32 %v105, %v144
    %s149 = scalar_lea.vmem %s0, 12
    %v150 = vld [vmem:[%s149] sm:$0xf]
    %v153 = vunpack.c.l.s4 1966171168
    %v154 = vunpack.c.0.s8 %v153
    %v155 = vlaneseq
    %v156 = vshrl.u32 %v155, 7
    %v157 = vsub.s32 %v154, %v156
    %v158 = vrot.slane %v150, %v157
    %v159 = vcombine.high %v158, %v158
    %v160 = vlaneseq
    %v161 = vshrl.u32 %v160, 7
    %v162 = vsub.s32 0, %v161
    %v163 = vrot.slane %v158, %v162
    %v164 = vlaneseq
    %v165 = vshrl.u32 %v164, 7
    %v166 = vsub.s32 1, %v165
    %v167 = vrot.slane %v158, %v166
    %v168 = vlaneseq
    %v169 = vshrl.u32 %v168, 7
    %v170 = vsub.s32 0, %v169
    %v171 = vrot.slane %v159, %v170
    %v172 = vlaneseq
    %v173 = vshrl.u32 %v172, 7
    %v174 = vsub.s32 1, %v173
    %v175 = vrot.slane %v159, %v174
    %180 = vset.pattern.permute.xlu0 3
    %181 = vperm.xlu0 %180, %v15
    %v182 = vpop.permute.xlu0 %181
    %v184 = vmul.f32 %v163, %v182
    %v185 = vmul.f32 %v167, %v182
    %v186 = vmul.f32 %v171, %v182
    %v187 = vmul.f32 %v175, %v182
    %v188 = vadd.f32 %v145, %v184
    %v189 = vadd.f32 %v146, %v185
    %v190 = vadd.f32 %v147, %v186
    %v191 = vadd.f32 %v148, %v187
    %s192 = scalar_lea.vmem %s0, 16
    %v193 = vld [vmem:[%s192] sm:$0xf]
    %v196 = vunpack.c.l.s4 1966171168
    %v197 = vunpack.c.0.s8 %v196
    %v198 = vlaneseq
    %v199 = vshrl.u32 %v198, 7
    %v200 = vsub.s32 %v197, %v199
    %v201 = vrot.slane %v193, %v200
    %v202 = vcombine.high %v201, %v201
    %v203 = vlaneseq
    %v204 = vshrl.u32 %v203, 7
    %v205 = vsub.s32 0, %v204
    %v206 = vrot.slane %v201, %v205
    %v207 = vlaneseq
    %v208 = vshrl.u32 %v207, 7
    %v209 = vsub.s32 1, %v208
    %v210 = vrot.slane %v201, %v209
    %v211 = vlaneseq
    %v212 = vshrl.u32 %v211, 7
    %v213 = vsub.s32 0, %v212
    %v214 = vrot.slane %v202, %v213
    %v215 = vlaneseq
    %v216 = vshrl.u32 %v215, 7
    %v217 = vsub.s32 1, %v216
    %v218 = vrot.slane %v202, %v217
    %223 = vset.pattern.permute.xlu0 4
    %224 = vperm.xlu0 %223, %v15
    %v225 = vpop.permute.xlu0 %224
    %v227 = vmul.f32 %v206, %v225
    %v228 = vmul.f32 %v210, %v225
    %v229 = vmul.f32 %v214, %v225
    %v230 = vmul.f32 %v218, %v225
    %v231 = vadd.f32 %v188, %v227
    %v232 = vadd.f32 %v189, %v228
    %v233 = vadd.f32 %v190, %v229
    %v234 = vadd.f32 %v191, %v230
    %s235 = scalar_lea.vmem %s0, 20
    %v236 = vld [vmem:[%s235] sm:$0xf]
    %v239 = vunpack.c.l.s4 1966171168
    %v240 = vunpack.c.0.s8 %v239
    %v241 = vlaneseq
    %v242 = vshrl.u32 %v241, 7
    %v243 = vsub.s32 %v240, %v242
    %v244 = vrot.slane %v236, %v243
    %v245 = vcombine.high %v244, %v244
    %v246 = vlaneseq
    %v247 = vshrl.u32 %v246, 7
    %v248 = vsub.s32 0, %v247
    %v249 = vrot.slane %v244, %v248
    %v250 = vlaneseq
    %v251 = vshrl.u32 %v250, 7
    %v252 = vsub.s32 1, %v251
    %v253 = vrot.slane %v244, %v252
    %v254 = vlaneseq
    %v255 = vshrl.u32 %v254, 7
    %v256 = vsub.s32 0, %v255
    %v257 = vrot.slane %v245, %v256
    %v258 = vlaneseq
    %v259 = vshrl.u32 %v258, 7
    %v260 = vsub.s32 1, %v259
    %v261 = vrot.slane %v245, %v260
    %266 = vset.pattern.permute.xlu0 5
    %267 = vperm.xlu0 %266, %v15
    %v268 = vpop.permute.xlu0 %267
    %v270 = vmul.f32 %v249, %v268
    %v271 = vmul.f32 %v253, %v268
    %v272 = vmul.f32 %v257, %v268
    %v273 = vmul.f32 %v261, %v268
    %v274 = vadd.f32 %v231, %v270
    %v275 = vadd.f32 %v232, %v271
    %v276 = vadd.f32 %v233, %v272
    %v277 = vadd.f32 %v234, %v273
    %s278 = scalar_lea.vmem %s0, 24
    %v279 = vld [vmem:[%s278] sm:$0xf]
    %v282 = vunpack.c.l.s4 1966171168
    %v283 = vunpack.c.0.s8 %v282
    %v284 = vlaneseq
    %v285 = vshrl.u32 %v284, 7
    %v286 = vsub.s32 %v283, %v285
    %v287 = vrot.slane %v279, %v286
    %v288 = vcombine.high %v287, %v287
    %v289 = vlaneseq
    %v290 = vshrl.u32 %v289, 7
    %v291 = vsub.s32 0, %v290
    %v292 = vrot.slane %v287, %v291
    %v293 = vlaneseq
    %v294 = vshrl.u32 %v293, 7
    %v295 = vsub.s32 1, %v294
    %v296 = vrot.slane %v287, %v295
    %v297 = vlaneseq
    %v298 = vshrl.u32 %v297, 7
    %v299 = vsub.s32 0, %v298
    %v300 = vrot.slane %v288, %v299
    %v301 = vlaneseq
    %v302 = vshrl.u32 %v301, 7
    %v303 = vsub.s32 1, %v302
    %v304 = vrot.slane %v288, %v303
    %309 = vset.pattern.permute.xlu0 6
    %310 = vperm.xlu0 %309, %v15
    %v311 = vpop.permute.xlu0 %310
    %v313 = vmul.f32 %v292, %v311
    %v314 = vmul.f32 %v296, %v311
    %v315 = vmul.f32 %v300, %v311
    %v316 = vmul.f32 %v304, %v311
    %v317 = vadd.f32 %v274, %v313
    %v318 = vadd.f32 %v275, %v314
    %v319 = vadd.f32 %v276, %v315
    %v320 = vadd.f32 %v277, %v316
    %s321 = scalar_lea.vmem %s0, 28
    %v322 = vld [vmem:[%s321] sm:$0xf]
    %v325 = vunpack.c.l.s4 1966171168
    %v326 = vunpack.c.0.s8 %v325
    %v327 = vlaneseq
    %v328 = vshrl.u32 %v327, 7
    %v329 = vsub.s32 %v326, %v328
    %v330 = vrot.slane %v322, %v329
    %v331 = vcombine.high %v330, %v330
    %v332 = vlaneseq
    %v333 = vshrl.u32 %v332, 7
    %v334 = vsub.s32 0, %v333
    %v335 = vrot.slane %v330, %v334
    %v336 = vlaneseq
    %v337 = vshrl.u32 %v336, 7
    %v338 = vsub.s32 1, %v337
    %v339 = vrot.slane %v330, %v338
    %v340 = vlaneseq
    %v341 = vshrl.u32 %v340, 7
    %v342 = vsub.s32 0, %v341
    %v343 = vrot.slane %v331, %v342
    %v344 = vlaneseq
    %v345 = vshrl.u32 %v344, 7
    %v346 = vsub.s32 1, %v345
    %v347 = vrot.slane %v331, %v346
    %352 = vset.pattern.permute.xlu0 7
    %353 = vperm.xlu0 %352, %v15
    %v354 = vpop.permute.xlu0 %353
    %v356 = vmul.f32 %v335, %v354
    %v357 = vmul.f32 %v339, %v354
    %v358 = vmul.f32 %v343, %v354
    %v359 = vmul.f32 %v347, %v354
    %v360 = vadd.f32 %v317, %v356
    %v361 = vadd.f32 %v318, %v357
    %v362 = vadd.f32 %v319, %v358
    %v363 = vadd.f32 %v320, %v359
    %s364 = scalar_lea.vmem %s0, 32
    %v365 = vld [vmem:[%s364] sm:$0xf]
    %v368 = vunpack.c.l.s4 1966171168
    %v369 = vunpack.c.0.s8 %v368
    %v370 = vlaneseq
    %v371 = vshrl.u32 %v370, 7
    %v372 = vsub.s32 %v369, %v371
    %v373 = vrot.slane %v365, %v372
    %v374 = vcombine.high %v373, %v373
    %v375 = vlaneseq
    %v376 = vshrl.u32 %v375, 7
    %v377 = vsub.s32 0, %v376
    %v378 = vrot.slane %v373, %v377
    %v379 = vlaneseq
    %v380 = vshrl.u32 %v379, 7
    %v381 = vsub.s32 1, %v380
    %v382 = vrot.slane %v373, %v381
    %v383 = vlaneseq
    %v384 = vshrl.u32 %v383, 7
    %v385 = vsub.s32 0, %v384
    %v386 = vrot.slane %v374, %v385
    %v387 = vlaneseq
    %v388 = vshrl.u32 %v387, 7
    %v389 = vsub.s32 1, %v388
    %v390 = vrot.slane %v374, %v389
    %395 = vset.pattern.permute.xlu0 8
    %396 = vperm.xlu0 %395, %v15
    %v397 = vpop.permute.xlu0 %396
    %v399 = vmul.f32 %v378, %v397
    %v400 = vmul.f32 %v382, %v397
    %v401 = vmul.f32 %v386, %v397
    %v402 = vmul.f32 %v390, %v397
    %v403 = vadd.f32 %v360, %v399
    %v404 = vadd.f32 %v361, %v400
    %v405 = vadd.f32 %v362, %v401
    %v406 = vadd.f32 %v363, %v402
    %v407 = vmax.f32 %v403, 0.0
    %v408 = vmax.f32 %v404, 0.0
    %v409 = vmax.f32 %v405, 0.0
    %v410 = vmax.f32 %v406, 0.0
    %v411 = vadd.f32 %v407, %v408
    %412 = vadd.xlane.f32.xlu0 %v411
    %v413 = vpop.xlane.xlu0 %412
    %v414 = vadd.f32 %v409, %v410
    %415 = vadd.xlane.f32.xlu0 %v414
    %v416 = vpop.xlane.xlu0 %415
    %v417 = vld [vmem:[%s2] sm:$0xff]
    %v418 = vld [vmem:[%s2 + $0x8] sm:$0x1]
    %v419 = vmul.f32 %v413, %v417
    %v420 = vmul.f32 %v416, %v417
    %vm421 = vcmask 80896
    %v422 = vsel %vm421, %v419, 0.0
    %v423 = vrot.slane %v422, 4
    %v424 = vadd.f32 %v422, %v423
    %v425 = vrot.slane %v424, 2
    %v426 = vadd.f32 %v424, %v425
    %v427 = vrot.slane %v426, 1
    %v428 = vadd.f32 %v426, %v427
    %v429 = vsel %vm421, %v420, 0.0
    %v430 = vrot.slane %v429, 4
    %v431 = vadd.f32 %v429, %v430
    %v432 = vrot.slane %v431, 2
    %v433 = vadd.f32 %v431, %v432
    %v434 = vrot.slane %v433, 1
    %v435 = vadd.f32 %v433, %v434
    %v436 = vlaneseq
    %v437 = vshrl.u32 %v436, 7
    %v438 = vsub.s32 0, %v437
    %v439 = vrot.slane %v418, %v438
    %v440 = vadd.f32 %v428, %v439
    %v441 = vadd.f32 %v435, %v439
    %v444 = vrot.slane %v441, 7
    %vm445 = vcmask 1041409
    %v446 = vsel %vm445, %v444, %v440
    %vm448 = vcmask 74752
    %449 = vst.msk [vmem:[#allocation2] sm:$0x3] %vm448, %v446
    // Predicated region
    $region14: #{local_cnn_forward.1} parent=1 // pred_check
      _
    $region15: #{local_cnn_forward.1} parent=1 // pred_check_branch
      %451 = sbr.rel (0) target = $region17
    $region16: #{local_cnn_forward.1} parent=1 // pred_region
      %s453 = ssub.s32 32, 32
      %454 = vsyncadd [#allocation3], %s453
      %s456 = sshll.u32 [#allocation2], 4
      %s457 = int_to_ptr.vmem [resolvable:$true] %s456
      %459 = dma.vmem_to_hbm [thread:$0]  %s457, 32, %s3, [#allocation3]
    $region17: #{local_cnn_forward.1} parent=1 // pred_fallthru
      _
    // Predicated region
    $region18: #{local_cnn_forward.1} parent=1 // pred_check
      _
    $region19: #{local_cnn_forward.1} parent=1 // pred_check_branch
      %461 = sbr.rel (0) target = $region21
    $region20: #{local_cnn_forward.1} parent=1 // pred_region
      %462 = dma.done [#allocation3], 32
    $region21: #{local_cnn_forward.1} parent=1 // pred_fallthru
      _
    %463 = vsyncpa [#allocation3], 1

</llo_original>
